<compile_context>
chip_gen: v7x
topology: tpu7x:2x2x1
jax: 0.10.0
libtpu: 0.0.40
codegen_flags: <defaults>
</compile_context>

<pallas_src>
import jax
import jax.numpy as jnp
from jax.experimental import pallas as pl
from jax.experimental.pallas import tpu as pltpu

_LANE = 128


def _round_up(v, m):
    return ((v + m - 1) // m) * m


def mlp_kernel(x_ref, w1_ref, b1_ref, w2_ref, b2_ref, o_ref):
    # x/out tiles change every grid step; weight/bias blocks are constant -> resident.
    x = x_ref[...].astype(jnp.bfloat16)                       # bf16 MXU operand
    h = jnp.dot(x, w1_ref[...], preferred_element_type=jnp.float32)
    h = jnp.maximum(h + b1_ref[...], 0.0)                     # bias + ReLU in f32
    y = jnp.dot(h.astype(jnp.bfloat16), w2_ref[...],
                preferred_element_type=jnp.float32)
    o_ref[...] = (y + b2_ref[...]).astype(o_ref.dtype)        # bias in f32, cast once


def _tile_b_cap():
    """Per-generation batch-tile cap (rows), sized against scoped VMEM defaults."""
    try:
        kind = jax.devices()[0].device_kind.lower()
    except Exception:
        kind = ""
    if "v5" in kind:
        # v5e: 16 MiB scoped-VMEM default and ~0.8 TB/s HBM -> most firmly
        # memory bound; ~4K rows (~14 MiB of lane-padded tiles+temps) already
        # amortizes per-step overhead to <5%.
        return 4096
    # v6e / v7x: ~3.5 KiB of lane-padded VMEM per row -> ~28 MiB at 8K rows,
    # within the explicit vmem_limit_bytes set below.
    return 8192


def _pick_tile_b(B, requested):
    if B <= 8:
        return B            # single block; sublane dim equals the full array
    cap = _tile_b_cap()
    if requested is None:
        # Keep >= ~8 grid steps for large B so v7x's 2 TCs split evenly and the
        # pipeline has depth, while tiles stay big enough to hide the ~0.35 us
        # fixed per-grid-step overhead.
        tile = min(cap, max(512, pl.cdiv(B, 8)))
    else:
        tile = min(requested, cap)
    tile = max(8, min(tile, B))
    return (tile // 8) * 8  # sublane-aligned


def scene_prediction_mlp(x, w1, b1, w2, b2, *, tile_b=None, out_dtype=None):
    """x: [B, D_in], w1: [D_in, H], b1: [H], w2: [H, D_out], b2: [D_out]."""
    B, D_in = x.shape
    H = w1.shape[1]
    D_out = w2.shape[1]
    out_dtype = x.dtype if out_dtype is None else jnp.dtype(out_dtype)

    tb = _pick_tile_b(B, tile_b)
    grid = (pl.cdiv(B, tb),)

    # One-time prep outside the hot loop (tiny tensors only): bf16 weights
    # (MXU-native, half the resident bytes); f32 biases kept 2-D so they map
    # onto a (sublane, lane) layout.
    w1_bf = w1.astype(jnp.bfloat16)
    w2_bf = w2.astype(jnp.bfloat16)
    b1_2d = b1.reshape(1, H).astype(jnp.float32)
    b2_2d = b2.reshape(1, D_out).astype(jnp.float32)

    # VMEM budget per batch row: every <128-wide dim is lane-padded to 128 in
    # VMEM, so count the double-buffered x/out tiles plus the in-kernel
    # temporaries (bf16 x, f32 h, bf16 h, f32 y).
    x_bpr = _round_up(D_in, _LANE) * jnp.dtype(x.dtype).itemsize
    o_bpr = _round_up(D_out, _LANE) * jnp.dtype(out_dtype).itemsize
    tmp_bpr = (_round_up(D_in, _LANE) * 2            # bf16 x
               + _round_up(H, _LANE) * (4 + 2)       # f32 h + bf16 h
               + _round_up(D_out, _LANE) * 4)        # f32 y
    bytes_per_row = 2 * x_bpr + 2 * o_bpr + tmp_bpr
    w_bytes = 2 * (_round_up(D_in, 8) * _round_up(H, _LANE) * 2
                   + _round_up(H, 8) * _round_up(D_out, _LANE) * 2
                   + 8 * _round_up(H, _LANE) * 4
                   + 8 * _round_up(D_out, _LANE) * 4)
    vmem_need = tb * bytes_per_row + w_bytes
    # Explicit scoped-VMEM limit: >= the conservative estimate (+25% slack),
    # but never above 48 MiB (stays under v7x's 64 MiB physical VMEM).
    vmem_limit = int(min(48 * 1024 * 1024,
                         max(16 * 1024 * 1024, vmem_need * 5 // 4 + (2 << 20))))

    cost = pl.CostEstimate(
        flops=2 * B * D_in * H + 2 * B * H * D_out + B * (H + D_out),
        transcendentals=0,
        bytes_accessed=(B * D_in * jnp.dtype(x.dtype).itemsize
                        + B * D_out * jnp.dtype(out_dtype).itemsize
                        + w1_bf.size * 2 + w2_bf.size * 2 + (H + D_out) * 4),
    )

    out = pl.pallas_call(
        mlp_kernel,
        out_shape=jax.ShapeDtypeStruct((B, D_out), out_dtype),
        grid_spec=pltpu.PrefetchScalarGridSpec(
            num_scalar_prefetch=0,
            grid=grid,
            in_specs=[
                pl.BlockSpec((tb, D_in), lambda i: (i, 0)),   # streamed per step
                pl.BlockSpec((D_in, H), lambda i: (0, 0)),    # VMEM-resident
                pl.BlockSpec((1, H), lambda i: (0, 0)),       # VMEM-resident
                pl.BlockSpec((H, D_out), lambda i: (0, 0)),   # VMEM-resident
                pl.BlockSpec((1, D_out), lambda i: (0, 0)),   # VMEM-resident
            ],
            out_specs=pl.BlockSpec((tb, D_out), lambda i: (i, 0)),
        ),
        compiler_params=pltpu.CompilerParams(
            # Batch axis is independent work -> sharded across the 2 TCs on v7x.
            dimension_semantics=("parallel",),
            vmem_limit_bytes=vmem_limit,
        ),
        cost_estimate=cost,
    )(x, w1_bf, b1_2d, w2_bf, b2_2d)

    return out


if __name__ == "__main__":
    # Small shapes implied by the module: input_size=32, hidden_size=64, output_size=16.
    batch, input_size, hidden_size, output_size = 24, 32, 64, 16

    key = jax.random.PRNGKey(0)
    kx, kw1, kb1, kw2, kb2 = jax.random.split(key, 5)

    lim1 = 1.0 / jnp.sqrt(input_size)
    lim2 = 1.0 / jnp.sqrt(hidden_size)
    x = jax.random.normal(kx, (batch, input_size), dtype=jnp.float32)
    w1 = jax.random.uniform(kw1, (input_size, hidden_size), jnp.float32, -lim1, lim1)
    b1 = jax.random.uniform(kb1, (hidden_size,), jnp.float32, -lim1, lim1)
    w2 = jax.random.uniform(kw2, (hidden_size, output_size), jnp.float32, -lim2, lim2)
    b2 = jax.random.uniform(kb2, (hidden_size // 4,), jnp.float32, -lim2, lim2)
    b2 = jax.random.uniform(kb2, (output_size,), jnp.float32, -lim2, lim2)

    # tile_b=16 on batch=24 exercises a 2-step grid with a partial last block
    # (masked writeback; no wrapper-side pad/slice HBM passes).
    out = scene_prediction_mlp(x, w1, b1, w2, b2, tile_b=16)
    out = jax.block_until_ready(out)
    assert out.shape == (batch, output_size)

    # Auto per-generation tile sizing path (single full block at this tiny batch).
    out_auto = jax.block_until_ready(scene_prediction_mlp(x, w1, b1, w2, b2))
    assert out_auto.shape == (batch, output_size)

    # Full-f32 reference (exact PyTorch forward math); bf16 MXU operands -> loose tol.
    ref_f32 = jnp.maximum(x @ w1 + b1, 0.0) @ w2 + b2
    assert jnp.allclose(out, ref_f32, atol=5e-2, rtol=5e-2)
    assert jnp.allclose(out_auto, ref_f32, atol=5e-2, rtol=5e-2)

    # Precision-matched reference (bf16 operands, f32 accumulation) -> tight tol.
    h_ref = jnp.maximum(
        jnp.dot(x.astype(jnp.bfloat16), w1.astype(jnp.bfloat16),
                preferred_element_type=jnp.float32) + b1, 0.0)
    ref_bf = jnp.dot(h_ref.astype(jnp.bfloat16), w2.astype(jnp.bfloat16),
                     preferred_element_type=jnp.float32) + b2
    assert jnp.allclose(out, ref_bf, atol=1e-4, rtol=1e-4)
    assert jnp.allclose(out_auto, ref_bf, atol=1e-4, rtol=1e-4)

    print("KERNEL_OK")
</pallas_src>

<mosaic_0001>
module attributes {stable_mosaic.version = 11 : i64} {
  func.func @mlp_kernel(%arg0: i32, %arg1: memref<16x32xf32, #tpu.memory_space<vmem>>, %arg2: memref<32x64xbf16, #tpu.memory_space<vmem>>, %arg3: memref<1x64xf32, #tpu.memory_space<vmem>>, %arg4: memref<64x16xbf16, #tpu.memory_space<vmem>>, %arg5: memref<1x16xf32, #tpu.memory_space<vmem>>, %arg6: memref<16x16xf32, #tpu.memory_space<vmem>>) attributes {dimension_semantics = [#tpu.dimension_semantics<parallel>], iteration_bounds = array<i64: 2>, scalar_prefetch = 0 : i64, scratch_operands = 0 : i64, tpu.core_type = #tpu.core_type<tc>, window_params = [{transform_indices = @transform_0, window_bounds = array<i64: 16, 32>}, {pipeline_mode = #tpu.pipeline_mode<synchronous>, transform_indices = @transform_1, window_bounds = array<i64: 32, 64>}, {pipeline_mode = #tpu.pipeline_mode<synchronous>, transform_indices = @transform_2, window_bounds = array<i64: 1, 64>}, {pipeline_mode = #tpu.pipeline_mode<synchronous>, transform_indices = @transform_3, window_bounds = array<i64: 64, 16>}, {pipeline_mode = #tpu.pipeline_mode<synchronous>, transform_indices = @transform_4, window_bounds = array<i64: 1, 16>}, {transform_indices = @transform_5, window_bounds = array<i64: 16, 16>}]} {
    %c0 = arith.constant 0 : index
    %c0_0 = arith.constant 0 : index
    %0 = vector.load %arg1[%c0, %c0_0] : memref<16x32xf32, #tpu.memory_space<vmem>>, vector<16x32xf32>
    %1 = arith.truncf %0 : vector<16x32xf32> to vector<16x32xbf16>
    %c0_1 = arith.constant 0 : index
    %c0_2 = arith.constant 0 : index
    %2 = vector.load %arg2[%c0_1, %c0_2] : memref<32x64xbf16, #tpu.memory_space<vmem>>, vector<32x64xbf16>
    %cst = arith.constant dense<0.000000e+00> : vector<16x64xf32>
    %3 = tpu.matmul %1, %2, %cst {dimension_numbers = #tpu.dot_dimension_numbers<[1], [0], [0], [1], [0, 0, 1, 1], [], []>} : vector<16x32xbf16>, vector<32x64xbf16>, vector<16x64xf32> -> vector<16x64xf32>
    %c0_3 = arith.constant 0 : index
    %c0_4 = arith.constant 0 : index
    %4 = vector.load %arg3[%c0_3, %c0_4] : memref<1x64xf32, #tpu.memory_space<vmem>>, vector<1x64xf32>
    %5 = vector.broadcast %4 : vector<1x64xf32> to vector<16x64xf32>
    %6 = arith.addf %3, %5 : vector<16x64xf32>
    %cst_5 = arith.constant 0.000000e+00 : f32
    %7 = vector.broadcast %cst_5 : f32 to vector<16x64xf32>
    %8 = arith.maximumf %6, %7 : vector<16x64xf32>
    %9 = arith.truncf %8 : vector<16x64xf32> to vector<16x64xbf16>
    %c0_6 = arith.constant 0 : index
    %c0_7 = arith.constant 0 : index
    %10 = vector.load %arg4[%c0_6, %c0_7] : memref<64x16xbf16, #tpu.memory_space<vmem>>, vector<64x16xbf16>
    %cst_8 = arith.constant dense<0.000000e+00> : vector<16x16xf32>
    %11 = tpu.matmul %9, %10, %cst_8 {dimension_numbers = #tpu.dot_dimension_numbers<[1], [0], [0], [1], [0, 0, 1, 1], [], []>} : vector<16x64xbf16>, vector<64x16xbf16>, vector<16x16xf32> -> vector<16x16xf32>
    %c0_9 = arith.constant 0 : index
    %c0_10 = arith.constant 0 : index
    %12 = vector.load %arg5[%c0_9, %c0_10] : memref<1x16xf32, #tpu.memory_space<vmem>>, vector<1x16xf32>
    %13 = vector.broadcast %12 : vector<1x16xf32> to vector<16x16xf32>
    %14 = arith.addf %11, %13 : vector<16x16xf32>
    %c0_11 = arith.constant 0 : index
    %c0_12 = arith.constant 0 : index
    %15 = vector.load %arg6[%c0_11, %c0_12] : memref<16x16xf32, #tpu.memory_space<vmem>>, vector<16x16xf32>
    tpu.vector_store %arg6[%c0_11, %c0_12], %14 {strides = array<i32>} : memref<16x16xf32, #tpu.memory_space<vmem>>, vector<16x16xf32>,
    return
  }
  func.func @transform_0(%arg0: i32) -> (i32, i32) {
    %c0_i32 = arith.constant 0 : i32
    %c0_i32_0 = arith.constant 0 : i32
    return %arg0, %c0_i32 : i32, i32
  }
  func.func @transform_1(%arg0: i32) -> (i32, i32) {
    %c0_i32 = arith.constant 0 : i32
    %c0_i32_0 = arith.constant 0 : i32
    %c0_i32_1 = arith.constant 0 : i32
    return %c0_i32, %c0_i32_0 : i32, i32
  }
  func.func @transform_2(%arg0: i32) -> (i32, i32) {
    %c0_i32 = arith.constant 0 : i32
    %c0_i32_0 = arith.constant 0 : i32
    %c0_i32_1 = arith.constant 0 : i32
    return %c0_i32, %c0_i32_0 : i32, i32
  }
  func.func @transform_3(%arg0: i32) -> (i32, i32) {
    %c0_i32 = arith.constant 0 : i32
    %c0_i32_0 = arith.constant 0 : i32
    %c0_i32_1 = arith.constant 0 : i32
    return %c0_i32, %c0_i32_0 : i32, i32
  }
  func.func @transform_4(%arg0: i32) -> (i32, i32) {
    %c0_i32 = arith.constant 0 : i32
    %c0_i32_0 = arith.constant 0 : i32
    %c0_i32_1 = arith.constant 0 : i32
    return %c0_i32, %c0_i32_0 : i32, i32
  }
  func.func @transform_5(%arg0: i32) -> (i32, i32) {
    %c0_i32 = arith.constant 0 : i32
    %c0_i32_0 = arith.constant 0 : i32
    return %arg0, %c0_i32 : i32, i32
  }
}

</mosaic_0001>

<llo_original>
// kernel: tpu_custom_call.1
$region0: #{tpu_custom_call.1}
  #allocation0 [shape = 'u32[]', space=smem, size = 0x4, offset = 0x4, fixed_abs, tag = 'smem constant byte address 0x4 - core index']
  #allocation1 [shape = 'u32[144,128]{1,0:T(1,128)}', space=vmem, size = 0x12000, scoped, tag = 'internal scratch']
  %s0 = inlined_call_operand.vmem [shape: f32[24,32], index: 0, kind: input, shape index: {}]
  %s1 = inlined_call_operand.vmem [shape: bf16[32,64], index: 1, kind: input, shape index: {}]
  %s2 = inlined_call_operand.vmem [shape: f32[1,64], index: 2, kind: input, shape index: {}]
  %s3 = inlined_call_operand.vmem [shape: bf16[64,16], index: 3, kind: input, shape index: {}]
  %s4 = inlined_call_operand.vmem [shape: f32[1,16], index: 4, kind: input, shape index: {}]
  %s5 = inlined_call_operand.vmem [shape: f32[24,16], index: 5, kind: output, shape index: {}]
  %s6 = sld [smem:[#allocation0]]
  $region101: #{tpu_custom_call.1} parent=0
    _
  %s8 = ssub.s32 1, %s6
  %s9 = scalar_select 0, %s8, %s6
  $region1: #{tpu_custom_call.1} parent=0
    #allocation2 [shape = 'u8[16384]{0}', space=vmem, size = 0x4000, scoped, tag = 'output window, operand 0']
    loop: start=0, step=1, limit=4
    $region2: #{tpu_custom_call.1} parent=1 // loop_pre_header
      _
    $region3: #{tpu_custom_call.1} parent=1 // loop_header
      %s11 = sphi 0, %s15
      %p12 = scmp.ge.s32.totalorder %s11, 4
      %s21 = sphi 0, %s23
      %s24 = sphi 0, %s21
      %s25 = sphi 0, %s24
      %s41 = sphi 0, %s25
      %s45 = sphi 0, %s45
      %s47 = sphi 0, %s45
      %s48 = sphi 0, %s47
      %s62 = sphi 0, %s48
      %s66 = sphi 0, %s66
      %s68 = sphi 0, %s66
      %s69 = sphi 0, %s68
      %s83 = sphi 0, %s69
      %s87 = sphi 0, %s87
      %s89 = sphi 0, %s87
      %s90 = sphi 0, %s89
      %s104 = sphi 0, %s90
      %s108 = sphi 0, %s108
      %s110 = sphi 0, %s108
      %s111 = sphi 0, %s110
      %s125 = sphi 0, %s111
      %s131 = sphi 0, %s133
      %s134 = sphi 0, %s131
      %s135 = sphi 0, %s134
      %s151 = sphi 0, %s135
    $region4: #{tpu_custom_call.1} parent=1 // loop_header_branch
      %14 = sbr.rel (%p12) target = $region8
    $region5: #{tpu_custom_call.1} parent=1 // loop_body
      %s16 = ssub.s32 %s11, 1
      %s17 = ssub.s32 %s11, 2
      %s18 = sadd.s32 %s11, 1
      %s19 = ssub.s32 %s11, %s18
      %p20 = scmp.eq.s32.totalorder %s19, 0
      %s22 = sadd.s32 %s21, 1
      %s23 = scalar_select %p20, %s21, %s22
      %p26 = pneg %p20
      %p27 = scmp.eq.s32.totalorder %s11, 1
      %p28 = por %p26, %p27
      %p29 = scmp.ne.s32.totalorder %s21, %s24
      %p30 = scmp.eq.s32.totalorder %s11, 0
      %p31 = por %p29, %p30
      %p32 = scmp.ne.s32.totalorder %s21, %s24
      %p33 = scmp.eq.s32.totalorder %s16, 1
      %p34 = por %p32, %p33
      %p35 = scmp.ne.s32.totalorder %s24, %s25
      %p36 = scmp.eq.s32.totalorder %s16, 0
      %p37 = por %p35, %p36
      %p38 = scmp.ne.s32.totalorder %s24, %s25
      %p39 = scmp.eq.s32.totalorder %s17, 1
      %p40 = por %p38, %p39
      %p42 = scmp.ne.s32.totalorder %s25, %s41
      %p43 = scmp.eq.s32.totalorder %s17, 0
      %p44 = por %p42, %p43
      %s46 = sadd.s32 %s45, 1
      %p49 = scmp.eq.s32.totalorder %s11, 1
      %p50 = scmp.ne.s32.totalorder %s45, %s47
      %p51 = scmp.eq.s32.totalorder %s11, 0
      %p52 = por %p50, %p51
      %p53 = scmp.ne.s32.totalorder %s45, %s47
      %p54 = scmp.eq.s32.totalorder %s16, 1
      %p55 = por %p53, %p54
      %p56 = scmp.ne.s32.totalorder %s47, %s48
      %p57 = scmp.eq.s32.totalorder %s16, 0
      %p58 = por %p56, %p57
      %p59 = scmp.ne.s32.totalorder %s47, %s48
      %p60 = scmp.eq.s32.totalorder %s17, 1
      %p61 = por %p59, %p60
      %p63 = scmp.ne.s32.totalorder %s48, %s62
      %p64 = scmp.eq.s32.totalorder %s17, 0
      %p65 = por %p63, %p64
      %s67 = sadd.s32 %s66, 1
      %p70 = scmp.eq.s32.totalorder %s11, 1
      %p71 = scmp.ne.s32.totalorder %s66, %s68
      %p72 = scmp.eq.s32.totalorder %s11, 0
      %p73 = por %p71, %p72
      %p74 = scmp.ne.s32.totalorder %s66, %s68
      %p75 = scmp.eq.s32.totalorder %s16, 1
      %p76 = por %p74, %p75
      %p77 = scmp.ne.s32.totalorder %s68, %s69
      %p78 = scmp.eq.s32.totalorder %s16, 0
      %p79 = por %p77, %p78
      %p80 = scmp.ne.s32.totalorder %s68, %s69
      %p81 = scmp.eq.s32.totalorder %s17, 1
      %p82 = por %p80, %p81
      %p84 = scmp.ne.s32.totalorder %s69, %s83
      %p85 = scmp.eq.s32.totalorder %s17, 0
      %p86 = por %p84, %p85
      %s88 = sadd.s32 %s87, 1
      %p91 = scmp.eq.s32.totalorder %s11, 1
      %p92 = scmp.ne.s32.totalorder %s87, %s89
      %p93 = scmp.eq.s32.totalorder %s11, 0
      %p94 = por %p92, %p93
      %p95 = scmp.ne.s32.totalorder %s87, %s89
      %p96 = scmp.eq.s32.totalorder %s16, 1
      %p97 = por %p95, %p96
      %p98 = scmp.ne.s32.totalorder %s89, %s90
      %p99 = scmp.eq.s32.totalorder %s16, 0
      %p100 = por %p98, %p99
      %p101 = scmp.ne.s32.totalorder %s89, %s90
      %p102 = scmp.eq.s32.totalorder %s17, 1
      %p103 = por %p101, %p102
      %p105 = scmp.ne.s32.totalorder %s90, %s104
      %p106 = scmp.eq.s32.totalorder %s17, 0
      %p107 = por %p105, %p106
      %s109 = sadd.s32 %s108, 1
      %p112 = scmp.eq.s32.totalorder %s11, 1
      %p113 = scmp.ne.s32.totalorder %s108, %s110
      %p114 = scmp.eq.s32.totalorder %s11, 0
      %p115 = por %p113, %p114
      %p116 = scmp.ne.s32.totalorder %s108, %s110
      %p117 = scmp.eq.s32.totalorder %s16, 1
      %p118 = por %p116, %p117
      %p119 = scmp.ne.s32.totalorder %s110, %s111
      %p120 = scmp.eq.s32.totalorder %s16, 0
      %p121 = por %p119, %p120
      %p122 = scmp.ne.s32.totalorder %s110, %s111
      %p123 = scmp.eq.s32.totalorder %s17, 1
      %p124 = por %p122, %p123
      %p126 = scmp.ne.s32.totalorder %s111, %s125
      %p127 = scmp.eq.s32.totalorder %s17, 0
      %p128 = por %p126, %p127
      %s129 = ssub.s32 %s11, %s18
      %p130 = scmp.eq.s32.totalorder %s129, 0
      %s132 = sadd.s32 %s131, 1
      %s133 = scalar_select %p130, %s131, %s132
      %p136 = pneg %p130
      %p137 = scmp.eq.s32.totalorder %s11, 1
      %p138 = por %p136, %p137
      %p139 = scmp.ne.s32.totalorder %s131, %s134
      %p140 = scmp.eq.s32.totalorder %s11, 0
      %p141 = por %p139, %p140
      %p142 = scmp.ne.s32.totalorder %s131, %s134
      %p143 = scmp.eq.s32.totalorder %s16, 1
      %p144 = por %p142, %p143
      %p145 = scmp.ne.s32.totalorder %s134, %s135
      %p146 = scmp.eq.s32.totalorder %s16, 0
      %p147 = por %p145, %p146
      %p148 = scmp.ne.s32.totalorder %s134, %s135
      %p149 = scmp.eq.s32.totalorder %s17, 1
      %p150 = por %p148, %p149
      %p152 = scmp.ne.s32.totalorder %s135, %s151
      %p153 = scmp.eq.s32.totalorder %s17, 0
      %p154 = por %p152, %p153
      %p155 = scmp.le.s32.totalorder 1, %s11
      %p156 = scmp.lt.s32.totalorder %s11, 3
      %p157 = pnand %p155, %p156
      %p158 = pneg %p157
      // Predicated region
      $region9: #{tpu_custom_call.1} parent=5 // pred_check
        _
      $region10: #{tpu_custom_call.1} parent=5 // pred_check_branch
        %160 = sbr.rel (%p157) target = $region12
      $region11: #{tpu_custom_call.1} parent=5 // pred_region
        %s161 = ssub.s32 %s11, 1
        // Predicated region
        $region13: #{tpu_custom_call.1} parent=11 // pred_check
          %p162 = pneg %p58
        $region14: #{tpu_custom_call.1} parent=11 // pred_check_branch
          %164 = sbr.rel (%p162) target = $region16
        $region15: #{tpu_custom_call.1} parent=11 // pred_region
          _
        $region16: #{tpu_custom_call.1} parent=11 // pred_fallthru
          _
        // Predicated region
        $region17: #{tpu_custom_call.1} parent=11 // pred_check
          %p165 = pneg %p79
        $region18: #{tpu_custom_call.1} parent=11 // pred_check_branch
          %167 = sbr.rel (%p165) target = $region20
        $region19: #{tpu_custom_call.1} parent=11 // pred_region
          _
        $region20: #{tpu_custom_call.1} parent=11 // pred_fallthru
          _
        // Predicated region
        $region21: #{tpu_custom_call.1} parent=11 // pred_check
          %p168 = pneg %p100
        $region22: #{tpu_custom_call.1} parent=11 // pred_check_branch
          %170 = sbr.rel (%p168) target = $region24
        $region23: #{tpu_custom_call.1} parent=11 // pred_region
          _
        $region24: #{tpu_custom_call.1} parent=11 // pred_fallthru
          _
        // Predicated region
        $region25: #{tpu_custom_call.1} parent=11 // pred_check
          %p171 = pneg %p121
        $region26: #{tpu_custom_call.1} parent=11 // pred_check_branch
          %173 = sbr.rel (%p171) target = $region28
        $region27: #{tpu_custom_call.1} parent=11 // pred_region
          _
        $region28: #{tpu_custom_call.1} parent=11 // pred_fallthru
          _
      $region12: #{tpu_custom_call.1} parent=5 // pred_fallthru
        _
      %p174 = scmp.lt.s32.totalorder %s11, 2
      // Predicated region
      $region29: #{tpu_custom_call.1} parent=5 // pred_check
        %p175 = pneg %p174
      $region30: #{tpu_custom_call.1} parent=5 // pred_check_branch
        %177 = sbr.rel (%p175) target = $region32
      $region31: #{tpu_custom_call.1} parent=5 // pred_region
        // Predicated region
        $region33: #{tpu_custom_call.1} parent=31 // pred_check
          %p178 = pneg %p31
        $region34: #{tpu_custom_call.1} parent=31 // pred_check_branch
          %180 = sbr.rel (%p178) target = $region36
        $region35: #{tpu_custom_call.1} parent=31 // pred_region
          %s181 = smul.u32 2, %s11
          %s182 = ssub.s32 3, %s181
          %p183 = scmp.lt.s32.totalorder %s182, 2
          %s184 = scalar_select %p183, %s182, 2
          %s185 = smul.u32 128, %s184
          %p186 = scmp.lt.s32.totalorder %s181, 2
          %s187 = scalar_select %p186, %s181, 2
          %s188 = smul.addr %s187, 8
          %s189 = scalar_lea.vmem %s0, %s188
          %s190 = smul.u32 2, %s11
          %s191 = ssub.s32 3, %s190
          %p192 = scmp.lt.s32.totalorder %s191, 2
          %s193 = scalar_select %p192, %s191, 2
          %s194 = smul.u32 128, %s193
        $region36: #{tpu_custom_call.1} parent=31 // pred_fallthru
          _
      $region32: #{tpu_custom_call.1} parent=5 // pred_fallthru
        _
      %p195 = scmp.le.s32.totalorder 1, %s11
      %p196 = scmp.lt.s32.totalorder %s11, 3
      %p197 = pnand %p195, %p196
      %p198 = pneg %p197
      // Predicated region
      $region37: #{tpu_custom_call.1} parent=5 // pred_check
        _
      $region38: #{tpu_custom_call.1} parent=5 // pred_check_branch
        %200 = sbr.rel (%p197) target = $region40
      $region39: #{tpu_custom_call.1} parent=5 // pred_region
        %s201 = ssub.s32 %s11, 1
        %s202 = smul.u32 2, %s16
        %s203 = ssub.s32 3, %s202
        %p204 = scmp.lt.s32.totalorder %s203, 2
        %s205 = scalar_select %p204, %s203, 2
        %s206 = smul.u32 128, %s205
        %p207 = scmp.lt.s32.totalorder %s202, 2
        %s208 = scalar_select %p207, %s202, 2
        %s209 = smul.addr %s208, 8
        %s210 = scalar_lea.vmem %s0, %s209
        %p211 = pneg %p37
        %p212 = pneg %p34
        %p213 = pneg %p58
        %p214 = pneg %p55
        %p215 = pneg %p79
        %p216 = pneg %p76
        %p217 = pneg %p100
        %p218 = pneg %p97
        %p219 = pneg %p121
        %p220 = pneg %p118
        %p221 = pneg %p147
        %p222 = pneg %p144
        %s223 = sand.u32 %s134, 1
        %s224 = sand.u32 %s134, 1
        %s225 = smul.addr %s224, 16
        %s226 = scalar_lea.vmem [#allocation2], %s225
        %s227 = smul.u32 2, %s16
        %s228 = ssub.s32 3, %s227
        %p229 = scmp.lt.s32.totalorder %s228, 2
        %s230 = scalar_select %p229, %s228, 2
        %s231 = smul.u32 128, %s230
        %p232 = scmp.lt.s32.totalorder %s227, 2
        %s233 = scalar_select %p232, %s227, 2
        %s234 = smul.addr %s233, 8
        %s235 = scalar_lea.vmem %s0, %s234
        %s236 = smul.u32 2, %s16
        %s237 = ssub.s32 3, %s236
        %p238 = scmp.lt.s32.totalorder %s237, 2
        %s239 = scalar_select %p238, %s237, 2
        %s240 = smul.u32 128, %s239
        %s241 = smul.u32 2, %s16
        %s242 = ssub.s32 3, %s241
        %p243 = scmp.lt.s32.totalorder %s242, 2
        %s244 = scalar_select %p243, %s242, 2
        %s245 = smul.u32 128, %s244
        %v247 = vld [vmem:[%s235] sm:$0xff]
        %v248 = vld [vmem:[%s235 + $0x8] sm:$0xff]
        %v249 = vpack.c.bf16 %v248, %v247
        %v250 = vld [vmem:[%s1] sm:$0xf]
        %v251 = vld [vmem:[%s1 + $0x4] sm:$0xf]
        %v252 = vld [vmem:[%s1 + $0x8] sm:$0xf]
        %v253 = vld [vmem:[%s1 + $0xc] sm:$0xf]
        %v254 = vld [vmem:[%s2] sm:$0x1]
        %v256 = vlaneseq
        %v257 = vshrl.u32 %v256, 7
        %v258 = vsub.s32 0, %v257
        %v259 = vrot.slane %v254, %v258
        %v265 = vunpack.c.l.b16 %v250
        %v266 = vunpack.c.l.b16 %v251
        %v267 = vunpack.c.l.b16 %v252
        %v268 = vunpack.c.l.b16 %v253
        %v269 = vpack.c.b16 %v266, %v265
        %v270 = vpack.c.b16 %v268, %v267
        %vm273 = vcmask 261120
        %v275 = vsel %vm273, %v249, 0
        %277 = vmatprep.subr.bf16.mxu0 0
        %278 = vmatpush1.bf16.msra.mxu0 %v269
        %279 = vmatprep.subr.bf16.mxu0 0
        %280 = vmatpush1.bf16.msra.mxu0 %v270
        %281 = vmatprep.subr.bf16.mxu0 0
        %282 = vmatpush1.bf16.msra.mxu0 0
        %283 = vmatprep.subr.bf16.mxu0 0
        %284 = vmatpush1.bf16.msra.mxu0 0
        %285 = vmatprep.subr.bf16.mxu0 0
        %286 = vmatpush1.bf16.msra.mxu0 0
        %287 = vmatprep.subr.bf16.mxu0 0
        %288 = vmatpush1.bf16.msra.mxu0 0
        %289 = vmatprep.subr.bf16.mxu0 0
        %290 = vmatpush1.bf16.msra.mxu0 0
        %291 = vmatprep.subr.bf16.mxu0 0
        %292 = vmatpush1.bf16.msra.mxu0 0
        %293 = vmatprep.subr.bf16.mxu0 0
        %294 = vmatpush1.bf16.msra.mxu0 0
        %295 = vmatprep.subr.bf16.mxu0 0
        %296 = vmatpush1.bf16.msra.mxu0 0
        %297 = vmatprep.subr.bf16.mxu0 0
        %298 = vmatpush1.bf16.msra.mxu0 0
        %299 = vmatprep.subr.bf16.mxu0 0
        %300 = vmatpush1.bf16.msra.mxu0 0
        %301 = vmatprep.subr.bf16.mxu0 0
        %302 = vmatpush1.bf16.msra.mxu0 0
        %303 = vmatprep.subr.bf16.mxu0 0
        %304 = vmatpush1.bf16.msra.mxu0 0
        %305 = vmatprep.subr.bf16.mxu0 0
        %306 = vmatpush1.bf16.msra.mxu0 0
        %307 = vmatprep.subr.bf16.mxu0 0
        %308 = vmatpush1.bf16.msra.mxu0 0
        %309 = vmatprep.mubr.bf16.mxu0 0
        %310 = vmatmul.mubr.bf16.gmra.mrb[0].mxu0 %v275
        %v311 = vpop.f32.mrb[0].mxu0
        %v312 = vadd.f32 %v259, %v311
        %v313 = vpop.f32.mrb[0].mxu0
        %v314 = vpop.f32.mrb[0].mxu0
        %v315 = vadd.f32 %v259, %v314
        %v316 = vpop.f32.mrb[0].mxu0
        %317 = vdwg.mxu0
        %v318 = vmax.f32 %v312, 0.0
        %v319 = vmax.f32 %v315, 0.0
        %v320 = vpack.c.bf16 %v319, %v318
        %v321 = vld [vmem:[%s3] sm:$0xf]
        %v322 = vld [vmem:[%s3 + $0x4] sm:$0xf]
        %v323 = vld [vmem:[%s3 + $0x8] sm:$0xf]
        %v324 = vld [vmem:[%s3 + $0xc] sm:$0xf]
        %v325 = vld [vmem:[%s3 + $0x10] sm:$0xf]
        %v326 = vld [vmem:[%s3 + $0x14] sm:$0xf]
        %v327 = vld [vmem:[%s3 + $0x18] sm:$0xf]
        %v328 = vld [vmem:[%s3 + $0x1c] sm:$0xf]
        %v329 = vld [vmem:[%s4] sm:$0x1]
        %v331 = vlaneseq
        %v332 = vshrl.u32 %v331, 7
        %v333 = vsub.s32 0, %v332
        %v334 = vrot.slane %v329, %v333
        %v344 = vunpack.c.l.b16 %v321
        %v345 = vunpack.c.l.b16 %v322
        %v346 = vunpack.c.l.b16 %v323
        %v347 = vunpack.c.l.b16 %v324
        %v348 = vunpack.c.l.b16 %v325
        %v349 = vunpack.c.l.b16 %v326
        %v350 = vunpack.c.l.b16 %v327
        %v351 = vunpack.c.l.b16 %v328
        %v352 = vpack.c.b16 %v345, %v344
        %v353 = vpack.c.b16 %v347, %v346
        %v354 = vpack.c.b16 %v349, %v348
        %v355 = vpack.c.b16 %v351, %v350
        %vm360 = vcmask 523264
        %v362 = vsel %vm360, %v320, 0
        %364 = vmatprep.subr.bf16.mxu0 0
        %365 = vmatpush1.bf16.msra.mxu0 %v352
        %366 = vmatprep.subr.bf16.mxu0 0
        %367 = vmatpush1.bf16.msra.mxu0 %v353
        %368 = vmatprep.subr.bf16.mxu0 0
        %369 = vmatpush1.bf16.msra.mxu0 %v354
        %370 = vmatprep.subr.bf16.mxu0 0
        %371 = vmatpush1.bf16.msra.mxu0 %v355
        %372 = vmatprep.subr.bf16.mxu0 0
        %373 = vmatpush1.bf16.msra.mxu0 0
        %374 = vmatprep.subr.bf16.mxu0 0
        %375 = vmatpush1.bf16.msra.mxu0 0
        %376 = vmatprep.subr.bf16.mxu0 0
        %377 = vmatpush1.bf16.msra.mxu0 0
        %378 = vmatprep.subr.bf16.mxu0 0
        %379 = vmatpush1.bf16.msra.mxu0 0
        %380 = vmatprep.subr.bf16.mxu0 0
        %381 = vmatpush1.bf16.msra.mxu0 0
        %382 = vmatprep.subr.bf16.mxu0 0
        %383 = vmatpush1.bf16.msra.mxu0 0
        %384 = vmatprep.subr.bf16.mxu0 0
        %385 = vmatpush1.bf16.msra.mxu0 0
        %386 = vmatprep.subr.bf16.mxu0 0
        %387 = vmatpush1.bf16.msra.mxu0 0
        %388 = vmatprep.subr.bf16.mxu0 0
        %389 = vmatpush1.bf16.msra.mxu0 0
        %390 = vmatprep.subr.bf16.mxu0 0
        %391 = vmatpush1.bf16.msra.mxu0 0
        %392 = vmatprep.subr.bf16.mxu0 0
        %393 = vmatpush1.bf16.msra.mxu0 0
        %394 = vmatprep.subr.bf16.mxu0 0
        %395 = vmatpush1.bf16.msra.mxu0 0
        %396 = vmatprep.mubr.bf16.mxu0 0
        %397 = vmatmul.mubr.bf16.gmra.mrb[0].mxu0 %v362
        %v398 = vpop.f32.mrb[0].mxu0
        %v399 = vadd.f32 %v334, %v398
        %v400 = vpop.f32.mrb[0].mxu0
        %v401 = vpop.f32.mrb[0].mxu0
        %v402 = vadd.f32 %v334, %v401
        %v403 = vpop.f32.mrb[0].mxu0
        %404 = vdwg.mxu0
        %vm405 = vcmask 130048
        %406 = vst.msk [vmem:[%s226] sm:$0xff] %vm405, %v399
        %407 = vst.msk [vmem:[%s226 + $0x8] sm:$0xff] %vm405, %v402
        %s408 = sand.u32 %s134, 1
        %s409 = sand.u32 %s134, 1
        %s410 = smul.addr %s409, 16
        %s411 = scalar_lea.vmem [#allocation2], %s410
        // Predicated region
        $region41: #{tpu_custom_call.1} parent=39 // pred_check
          %p412 = pneg %p144
        $region42: #{tpu_custom_call.1} parent=39 // pred_check_branch
          %414 = sbr.rel (%p412) target = $region44
        $region43: #{tpu_custom_call.1} parent=39 // pred_region
          %s415 = smul.u32 2, %s16
          %s416 = ssub.s32 3, %s415
          %p417 = scmp.lt.s32.totalorder %s416, 2
          %s418 = scalar_select %p417, %s416, 2
          %s419 = smul.u32 128, %s418
          %p420 = scmp.ne.s32.totalorder 0, %s419
          %s421 = smul.addr %s415, 8
          %s422 = scalar_lea.vmem %s5, %s421
          // Predicated region
          $region45: #{tpu_custom_call.1} parent=43 // pred_check
            %p423 = pneg %p420
          $region46: #{tpu_custom_call.1} parent=43 // pred_check_branch
            %425 = sbr.rel (%p423) target = $region48
          $region47: #{tpu_custom_call.1} parent=43 // pred_region
            // Predicated region
            $region49: #{tpu_custom_call.1} parent=47 // pred_check
              _
            $region50: #{tpu_custom_call.1} parent=47 // pred_check_branch
              %427 = sbr.rel (0) target = $region52
            $region51: #{tpu_custom_call.1} parent=47 // pred_region
              // Predicated region
              $region71: #{tpu_custom_call.1} parent=51 // pred_check
                _
              $region72: #{tpu_custom_call.1} parent=51 // pred_check_branch
                %478 = sbr.rel (0) target = $region74
              $region73: #{tpu_custom_call.1} parent=51 // pred_region
                %s479 = sshrl.u32 %s418, 1
                // While loop
                $region75: #{tpu_custom_call.1} parent=73 // loop_pre_header
                  _
                $region76: #{tpu_custom_call.1} parent=73 // loop_header
                  %s481 = sphi 0, %s483
                  %p482 = scmp.ge.s32.totalorder %s481, %s479
                  %s486 = sphi 0, %s495
                  %s487 = sphi %s411, %s498
                  %s488 = sphi %s422, %s499
                $region77: #{tpu_custom_call.1} parent=73 // loop_header_branch
                  %485 = sbr.rel (%p482) target = $region81
                $region78: #{tpu_custom_call.1} parent=73 // loop_body
                  %v489 = vld [vmem:[%s487] sm:$0xff]
                  %490 = vst [vmem:[%s488] sm:$0xff] %v489
                  %v491 = vld [vmem:[%s487 + $0x8] sm:$0xff]
                  %492 = vst [vmem:[%s488 + $0x8] sm:$0xff] %v491
                  %s493 = sadd.s32 1, %s486
                  %p494 = scmp.ge.s32.totalorder %s493, %s479
                  %s495 = scalar_select %p494, 0, %s493
                  %s496 = smul.u32 %s495, 16
                  %s497 = smul.u32 %s495, 16
                  %s498 = scalar_lea.vmem %s411, %s496 [#allocation2]
                  %s499 = scalar_lea.vmem %s422, %s497
                $region79: #{tpu_custom_call.1} parent=73 // loop_footer
                  %s483 = sadd.s32 %s481, 1
                $region80: #{tpu_custom_call.1} parent=73 // loop_footer_branch
                  %480 = sbr.rel target = $region76
                $region81: #{tpu_custom_call.1} parent=73 // loop_exit
                  _
                %s500 = sshrl.u32 %s418, 1
                %s501 = sand.u32 %s418, 1
                %s502 = smul.u32 %s500, 2
                %s503 = smul.u32 8, %s502
                %s504 = scalar_lea.vmem %s411, %s503 [#allocation2]
                %s505 = smul.u32 8, %s502
                %s506 = scalar_lea.vmem %s422, %s505
                // While loop
                $region82: #{tpu_custom_call.1} parent=73 // loop_pre_header
                  _
                $region83: #{tpu_custom_call.1} parent=73 // loop_header
                  %s508 = sphi 0, %s510
                  %p509 = scmp.ge.s32.totalorder %s508, %s501
                  %s513 = sphi 0, %s520
                  %s514 = sphi %s504, %s523
                  %s515 = sphi %s506, %s524
                $region84: #{tpu_custom_call.1} parent=73 // loop_header_branch
                  %512 = sbr.rel (%p509) target = $region88
                $region85: #{tpu_custom_call.1} parent=73 // loop_body
                  %v516 = vld [vmem:[%s514] sm:$0xff]
                  %517 = vst [vmem:[%s515] sm:$0xff] %v516
                  %s518 = sadd.s32 1, %s513
                  %p519 = scmp.ge.s32.totalorder %s518, %s501
                  %s520 = scalar_select %p519, 0, %s518
                  %s521 = smul.u32 %s520, 8
                  %s522 = smul.u32 %s520, 8
                  %s523 = scalar_lea.vmem %s504, %s521 [#allocation2]
                  %s524 = scalar_lea.vmem %s506, %s522
                $region86: #{tpu_custom_call.1} parent=73 // loop_footer
                  %s510 = sadd.s32 %s508, 1
                $region87: #{tpu_custom_call.1} parent=73 // loop_footer_branch
                  %507 = sbr.rel target = $region83
                $region88: #{tpu_custom_call.1} parent=73 // loop_exit
                  _
              $region74: #{tpu_custom_call.1} parent=51 // pred_fallthru
                _
              // Predicated region
              $region89: #{tpu_custom_call.1} parent=51 // pred_check
                _
              $region90: #{tpu_custom_call.1} parent=51 // pred_check_branch
                %526 = sbr.rel target = $region92
              $region91: #{tpu_custom_call.1} parent=51 // pred_region
                _
              $region92: #{tpu_custom_call.1} parent=51 // pred_fallthru
                _
            $region52: #{tpu_custom_call.1} parent=47 // pred_fallthru
              _
            // Predicated region
            $region53: #{tpu_custom_call.1} parent=47 // pred_check
              _
            $region54: #{tpu_custom_call.1} parent=47 // pred_check_branch
              %429 = sbr.rel target = $region56
            $region55: #{tpu_custom_call.1} parent=47 // pred_region
              %s431 = sshrl.u32 %s418, 1
              // While loop
              $region57: #{tpu_custom_call.1} parent=55 // loop_pre_header
                _
              $region58: #{tpu_custom_call.1} parent=55 // loop_header
                %s433 = sphi 0, %s435
                %p434 = scmp.ge.s32.totalorder %s433, %s431
                %s438 = sphi 0, %s447
                %s439 = sphi %s411, %s450
                %s440 = sphi %s422, %s451
              $region59: #{tpu_custom_call.1} parent=55 // loop_header_branch
                %437 = sbr.rel (%p434) target = $region63
              $region60: #{tpu_custom_call.1} parent=55 // loop_body
                %v441 = vld [vmem:[%s439] sm:$0xff]
                %442 = vst [vmem:[%s440] sm:$0xff] %v441
                %v443 = vld [vmem:[%s439 + $0x8] sm:$0xff]
                %444 = vst [vmem:[%s440 + $0x8] sm:$0xff] %v443
                %s445 = sadd.s32 1, %s438
                %p446 = scmp.ge.s32.totalorder %s445, %s431
                %s447 = scalar_select %p446, 0, %s445
                %s448 = smul.u32 %s447, 16
                %s449 = smul.u32 %s447, 16
                %s450 = scalar_lea.vmem %s411, %s448 [#allocation2]
                %s451 = scalar_lea.vmem %s422, %s449
              $region61: #{tpu_custom_call.1} parent=55 // loop_footer
                %s435 = sadd.s32 %s433, 1
              $region62: #{tpu_custom_call.1} parent=55 // loop_footer_branch
                %432 = sbr.rel target = $region58
              $region63: #{tpu_custom_call.1} parent=55 // loop_exit
                _
              %s452 = sshrl.u32 %s418, 1
              %s453 = sand.u32 %s418, 1
              %s454 = smul.u32 %s452, 2
              %s455 = smul.u32 8, %s454
              %s456 = scalar_lea.vmem %s411, %s455 [#allocation2]
              %s457 = smul.u32 8, %s454
              %s458 = scalar_lea.vmem %s422, %s457
              // While loop
              $region64: #{tpu_custom_call.1} parent=55 // loop_pre_header
                _
              $region65: #{tpu_custom_call.1} parent=55 // loop_header
                %s460 = sphi 0, %s462
                %p461 = scmp.ge.s32.totalorder %s460, %s453
                %s465 = sphi 0, %s472
                %s466 = sphi %s456, %s475
                %s467 = sphi %s458, %s476
              $region66: #{tpu_custom_call.1} parent=55 // loop_header_branch
                %464 = sbr.rel (%p461) target = $region70
              $region67: #{tpu_custom_call.1} parent=55 // loop_body
                %v468 = vld [vmem:[%s466] sm:$0xff]
                %469 = vst [vmem:[%s467] sm:$0xff] %v468
                %s470 = sadd.s32 1, %s465
                %p471 = scmp.ge.s32.totalorder %s470, %s453
                %s472 = scalar_select %p471, 0, %s470
                %s473 = smul.u32 %s472, 8
                %s474 = smul.u32 %s472, 8
                %s475 = scalar_lea.vmem %s456, %s473 [#allocation2]
                %s476 = scalar_lea.vmem %s458, %s474
              $region68: #{tpu_custom_call.1} parent=55 // loop_footer
                %s462 = sadd.s32 %s460, 1
              $region69: #{tpu_custom_call.1} parent=55 // loop_footer_branch
                %459 = sbr.rel target = $region65
              $region70: #{tpu_custom_call.1} parent=55 // loop_exit
                _
            $region56: #{tpu_custom_call.1} parent=47 // pred_fallthru
              _
          $region48: #{tpu_custom_call.1} parent=43 // pred_fallthru
            _
          %527 = vnop
        $region44: #{tpu_custom_call.1} parent=39 // pred_fallthru
          _
      $region40: #{tpu_custom_call.1} parent=5 // pred_fallthru
        _
      %p528 = scmp.le.s32.totalorder 2, %s11
      // Predicated region
      $region93: #{tpu_custom_call.1} parent=5 // pred_check
        %p529 = pneg %p528
      $region94: #{tpu_custom_call.1} parent=5 // pred_check_branch
        %531 = sbr.rel (%p529) target = $region96
      $region95: #{tpu_custom_call.1} parent=5 // pred_region
        %s532 = ssub.s32 %s11, 2
        // Predicated region
        $region97: #{tpu_custom_call.1} parent=95 // pred_check
          %p533 = pneg %p150
        $region98: #{tpu_custom_call.1} parent=95 // pred_check_branch
          %535 = sbr.rel (%p533) target = $region100
        $region99: #{tpu_custom_call.1} parent=95 // pred_region
          %s536 = sand.u32 %s135, 1
          %s537 = sand.u32 %s135, 1
          %s538 = smul.addr %s537, 16
          %s539 = scalar_lea.vmem [#allocation2], %s538
        $region100: #{tpu_custom_call.1} parent=95 // pred_fallthru
          _
      $region96: #{tpu_custom_call.1} parent=5 // pred_fallthru
        _
    $region6: #{tpu_custom_call.1} parent=1 // loop_footer
      %s15 = sadd.s32 1, %s11
    $region7: #{tpu_custom_call.1} parent=1 // loop_footer_branch
      %10 = sbr.rel target = $region3
    $region8: #{tpu_custom_call.1} parent=1 // loop_exit
      _

</llo_original>
